<compile_context>
chip_gen: v7x
topology: tpu7x:2x2x1
jax: 0.10.0
libtpu: 0.0.40
codegen_flags: <defaults>
</compile_context>

<pallas_src>
import functools

import jax
import jax.numpy as jnp
from jax.experimental import pallas as pl
from jax.experimental.pallas import tpu as pltpu  # noqa: F401 (no TPU-specific knobs needed at this footprint)

EPS = 1e-5
LANE = 128


def _packed_layout(n3, n2, n1, n_pad):
    """128-lane-aligned static offsets for the packed small-parameter vector."""
    names = [("b1", n3), ("g1", n3), ("be1", n3),
             ("b2", n2), ("g2", n2), ("be2", n2),
             ("b3", n1), ("g3", n1), ("be3", n1),
             ("b4", n_pad)]
    offs, off = {}, 0
    for name, n in names:
        offs[name] = off
        off += ((n + LANE - 1) // LANE) * LANE
    return offs, off


def decoder_kernel(x_ref, w1_ref, w2_ref, w3_ref, w4_ref, p_ref, out_ref, *, offs):
    """Single-step, straight-line kernel: (Linear->ReLU->BN)x3 -> Linear -> Sigmoid."""

    def seg(name, n):
        o = offs[name]                       # static, 128-aligned
        return p_ref[:, o:o + n]             # (1, n) f32

    def linear_relu_bn(h, w_ref, bname, gname, bename):
        n = w_ref.shape[1]
        # Linear (MXU: bf16 x bf16 -> f32 accumulate) + bias
        z = jnp.dot(h, w_ref[...], preferred_element_type=jnp.float32) + seg(bname, n)
        # ReLU (VPU)
        z = jnp.maximum(z, 0.0)
        # Train-mode BatchNorm1d folded into one per-feature scale/shift FMA (f32).
        inv_b = jnp.float32(1.0 / z.shape[0])
        s1 = jnp.sum(z, axis=0, keepdims=True)
        s2 = jnp.sum(z * z, axis=0, keepdims=True)
        mean = s1 * inv_b
        var = jnp.maximum(s2 * inv_b - mean * mean, 0.0)   # guard cancellation
        scale = seg(gname, n) * jax.lax.rsqrt(var + EPS)
        shift = seg(bename, n) - mean * scale
        return (z * scale + shift).astype(jnp.bfloat16)

    h = x_ref[...].astype(jnp.bfloat16)
    h = linear_relu_bn(h, w1_ref, "b1", "g1", "be1")
    h = linear_relu_bn(h, w2_ref, "b2", "g2", "be2")
    h = linear_relu_bn(h, w3_ref, "b3", "g3", "be3")

    # Final Linear + Sigmoid (EUP approx reciprocal; exp is EUP as well).
    n_pad = w4_ref.shape[1]
    z = jnp.dot(h, w4_ref[...], preferred_element_type=jnp.float32) + seg("b4", n_pad)
    out_ref[...] = pl.reciprocal(1.0 + jnp.exp(-z), approx=True).astype(out_ref.dtype)


@functools.partial(jax.jit, static_argnames=("output_size",))
def decoder_forward(x, w1, w2, w3, w4, packed, *, output_size):
    B = x.shape[0]
    n3, n2, n1, n_pad = w1.shape[1], w2.shape[1], w3.shape[1], w4.shape[1]
    offs, total = _packed_layout(n3, n2, n1, n_pad)
    assert packed.shape == (1, total)

    kernel = functools.partial(decoder_kernel, offs=offs)
    # Grid-less call: every input/output is a single whole-array VMEM block
    # (total footprint well under 1 MiB), so there is exactly one pipeline step.
    out_padded = pl.pallas_call(
        kernel,
        out_shape=jax.ShapeDtypeStruct((B, n_pad), jnp.float32),
    )(x, w1, w2, w3, w4, packed)
    return out_padded[:, :output_size]


def init_params(key, latent_size, n_hidden_3, n_hidden_2, n_hidden_1, output_size):
    """nn.Linear default init (U(-1/sqrt(fan_in), 1/sqrt(fan_in))); BN gamma=1, beta=0.
    Weights bf16, (in, out) layout; final layer's output features padded 784 -> 896."""
    n_pad = ((output_size + LANE - 1) // LANE) * LANE
    dims = [(latent_size, n_hidden_3), (n_hidden_3, n_hidden_2),
            (n_hidden_2, n_hidden_1), (n_hidden_1, output_size)]
    ws, bs = [], []
    for i, (fan_in, fan_out) in enumerate(dims):
        key, kw, kb = jax.random.split(key, 3)
        bound = 1.0 / (float(fan_in) ** 0.5)
        w = jax.random.uniform(kw, (fan_in, fan_out), jnp.float32, -bound, bound)
        b = jax.random.uniform(kb, (1, fan_out), jnp.float32, -bound, bound)
        if i == 3:  # pad final layer to a lane-dense multiple of 128 (784 -> 896)
            w = jnp.pad(w, ((0, 0), (0, n_pad - fan_out)))
            b = jnp.pad(b, ((0, 0), (0, n_pad - fan_out)))
        ws.append(w.astype(jnp.bfloat16))
        bs.append(b)
    gammas = [jnp.ones((1, n), jnp.float32) for n in (n_hidden_3, n_hidden_2, n_hidden_1)]
    betas = [jnp.zeros((1, n), jnp.float32) for n in (n_hidden_3, n_hidden_2, n_hidden_1)]
    return ws, bs, gammas, betas


def pack_small_params(bs, gammas, betas, n3, n2, n1, n_pad):
    """Pack biases + BN params into one (1, total) f32 array with 128-aligned offsets."""
    offs, total = _packed_layout(n3, n2, n1, n_pad)
    packed = jnp.zeros((1, total), jnp.float32)
    items = {"b1": bs[0], "g1": gammas[0], "be1": betas[0],
             "b2": bs[1], "g2": gammas[1], "be2": betas[1],
             "b3": bs[2], "g3": gammas[2], "be3": betas[2],
             "b4": bs[3]}
    for name, arr in items.items():
        packed = packed.at[:, offs[name]:offs[name] + arr.shape[1]].set(arr)
    return packed


def reference_forward(x, ws, bs, gammas, betas, output_size):
    """Pure-JAX f32 reference of the PyTorch forward (train-mode BN), using the same
    bf16-rounded weight values as the kernel."""
    def block(h, w, b, g, be):
        z = jnp.maximum(h @ w.astype(jnp.float32) + b, 0.0)
        mean = jnp.mean(z, axis=0, keepdims=True)
        var = jnp.mean((z - mean) ** 2, axis=0, keepdims=True)   # biased variance
        return (z - mean) / jnp.sqrt(var + EPS) * g + be

    h = x
    for i in range(3):
        h = block(h, ws[i], bs[i], gammas[i], betas[i])
    out = jax.nn.sigmoid(h @ ws[3].astype(jnp.float32) + bs[3])
    return out[:, :output_size]


if __name__ == "__main__":
    # hparams = {'latent_size': 16, 'n_hidden_3': 32, 'n_hidden_2': 64, 'n_hidden_1': 128}
    latent_size, n_hidden_3, n_hidden_2, n_hidden_1 = 16, 32, 64, 128
    output_size = 28 * 28
    B = 8

    key = jax.random.PRNGKey(0)
    key, kx = jax.random.split(key)
    x = jax.random.normal(kx, (B, latent_size), jnp.float32)

    ws, bs, gammas, betas = init_params(key, latent_size, n_hidden_3, n_hidden_2,
                                        n_hidden_1, output_size)
    n_pad = ws[3].shape[1]
    packed = pack_small_params(bs, gammas, betas, n_hidden_3, n_hidden_2, n_hidden_1, n_pad)

    out = decoder_forward(x, ws[0], ws[1], ws[2], ws[3], packed, output_size=output_size)
    out = jax.block_until_ready(out)

    ref = reference_forward(x, ws, bs, gammas, betas, output_size)
    assert out.shape == (B, output_size), out.shape
    # bf16 activations inside the kernel + approx-EUP sigmoid reciprocal -> loosened tolerance.
    assert jnp.allclose(out, ref, atol=2e-2, rtol=2e-2), float(jnp.max(jnp.abs(out - ref)))

    print("KERNEL_OK")
</pallas_src>

<mosaic_0001>
module attributes {stable_mosaic.version = 11 : i64} {
  func.func @decoder_kernel(%arg0: memref<8x16xf32, #tpu.memory_space<vmem>>, %arg1: memref<16x32xbf16, #tpu.memory_space<vmem>>, %arg2: memref<32x64xbf16, #tpu.memory_space<vmem>>, %arg3: memref<64x128xbf16, #tpu.memory_space<vmem>>, %arg4: memref<128x896xbf16, #tpu.memory_space<vmem>>, %arg5: memref<1x2048xf32, #tpu.memory_space<vmem>>, %arg6: memref<8x896xf32, #tpu.memory_space<vmem>>) attributes {dimension_semantics = [], scalar_prefetch = 0 : i64, scratch_operands = 0 : i64, tpu.core_type = #tpu.core_type<tc>} {
    %c0 = arith.constant 0 : index
    %c0_0 = arith.constant 0 : index
    %0 = vector.load %arg0[%c0, %c0_0] : memref<8x16xf32, #tpu.memory_space<vmem>>, vector<8x16xf32>
    %1 = arith.truncf %0 : vector<8x16xf32> to vector<8x16xbf16>
    %c0_1 = arith.constant 0 : index
    %c0_2 = arith.constant 0 : index
    %2 = vector.load %arg1[%c0_1, %c0_2] : memref<16x32xbf16, #tpu.memory_space<vmem>>, vector<16x32xbf16>
    %cst = arith.constant dense<0.000000e+00> : vector<8x32xf32>
    %3 = tpu.matmul %1, %2, %cst {dimension_numbers = #tpu.dot_dimension_numbers<[1], [0], [0], [1], [0, 0, 1, 1], [], []>} : vector<8x16xbf16>, vector<16x32xbf16>, vector<8x32xf32> -> vector<8x32xf32>
    %c0_3 = arith.constant 0 : index
    %c0_4 = arith.constant 0 : index
    %4 = vector.load %arg5[%c0_3, %c0_4] : memref<1x2048xf32, #tpu.memory_space<vmem>>, vector<1x32xf32>
    %5 = vector.broadcast %4 : vector<1x32xf32> to vector<8x32xf32>
    %6 = arith.addf %3, %5 : vector<8x32xf32>
    %cst_5 = arith.constant 0.000000e+00 : f32
    %7 = vector.broadcast %cst_5 : f32 to vector<8x32xf32>
    %8 = arith.maximumf %6, %7 : vector<8x32xf32>
    %cst_6 = arith.constant dense<0.000000e+00> : vector<32xf32>
    %9 = vector.multi_reduction <add>, %8, %cst_6 [0] : vector<8x32xf32> to vector<32xf32>
    %10 = vector.shape_cast %9 : vector<32xf32> to vector<1x32xf32>
    %11 = arith.mulf %8, %8 : vector<8x32xf32>
    %cst_7 = arith.constant dense<0.000000e+00> : vector<32xf32>
    %12 = vector.multi_reduction <add>, %11, %cst_7 [0] : vector<8x32xf32> to vector<32xf32>
    %13 = vector.shape_cast %12 : vector<32xf32> to vector<1x32xf32>
    %cst_8 = arith.constant 1.250000e-01 : f32
    %14 = vector.broadcast %cst_8 : f32 to vector<1x32xf32>
    %15 = arith.mulf %10, %14 : vector<1x32xf32>
    %cst_9 = arith.constant 1.250000e-01 : f32
    %16 = vector.broadcast %cst_9 : f32 to vector<1x32xf32>
    %17 = arith.mulf %13, %16 : vector<1x32xf32>
    %18 = arith.mulf %15, %15 : vector<1x32xf32>
    %19 = arith.subf %17, %18 : vector<1x32xf32>
    %cst_10 = arith.constant 0.000000e+00 : f32
    %20 = vector.broadcast %cst_10 : f32 to vector<1x32xf32>
    %21 = arith.maximumf %19, %20 : vector<1x32xf32>
    %c0_11 = arith.constant 0 : index
    %c128 = arith.constant 128 : index
    %22 = vector.load %arg5[%c0_11, %c128] : memref<1x2048xf32, #tpu.memory_space<vmem>>, vector<1x32xf32>
    %cst_12 = arith.constant 9.99999974E-6 : f32
    %23 = vector.broadcast %cst_12 : f32 to vector<1x32xf32>
    %24 = arith.addf %21, %23 : vector<1x32xf32>
    %25 = math.rsqrt %24 : vector<1x32xf32>
    %26 = arith.mulf %22, %25 : vector<1x32xf32>
    %c0_13 = arith.constant 0 : index
    %c256 = arith.constant 256 : index
    %27 = vector.load %arg5[%c0_13, %c256] : memref<1x2048xf32, #tpu.memory_space<vmem>>, vector<1x32xf32>
    %28 = arith.mulf %15, %26 : vector<1x32xf32>
    %29 = arith.subf %27, %28 : vector<1x32xf32>
    %30 = vector.broadcast %26 : vector<1x32xf32> to vector<8x32xf32>
    %31 = arith.mulf %8, %30 : vector<8x32xf32>
    %32 = vector.broadcast %29 : vector<1x32xf32> to vector<8x32xf32>
    %33 = arith.addf %31, %32 : vector<8x32xf32>
    %34 = arith.truncf %33 : vector<8x32xf32> to vector<8x32xbf16>
    %c0_14 = arith.constant 0 : index
    %c0_15 = arith.constant 0 : index
    %35 = vector.load %arg2[%c0_14, %c0_15] : memref<32x64xbf16, #tpu.memory_space<vmem>>, vector<32x64xbf16>
    %cst_16 = arith.constant dense<0.000000e+00> : vector<8x64xf32>
    %36 = tpu.matmul %34, %35, %cst_16 {dimension_numbers = #tpu.dot_dimension_numbers<[1], [0], [0], [1], [0, 0, 1, 1], [], []>} : vector<8x32xbf16>, vector<32x64xbf16>, vector<8x64xf32> -> vector<8x64xf32>
    %c0_17 = arith.constant 0 : index
    %c384 = arith.constant 384 : index
    %37 = vector.load %arg5[%c0_17, %c384] : memref<1x2048xf32, #tpu.memory_space<vmem>>, vector<1x64xf32>
    %38 = vector.broadcast %37 : vector<1x64xf32> to vector<8x64xf32>
    %39 = arith.addf %36, %38 : vector<8x64xf32>
    %cst_18 = arith.constant 0.000000e+00 : f32
    %40 = vector.broadcast %cst_18 : f32 to vector<8x64xf32>
    %41 = arith.maximumf %39, %40 : vector<8x64xf32>
    %cst_19 = arith.constant dense<0.000000e+00> : vector<64xf32>
    %42 = vector.multi_reduction <add>, %41, %cst_19 [0] : vector<8x64xf32> to vector<64xf32>
    %43 = vector.shape_cast %42 : vector<64xf32> to vector<1x64xf32>
    %44 = arith.mulf %41, %41 : vector<8x64xf32>
    %cst_20 = arith.constant dense<0.000000e+00> : vector<64xf32>
    %45 = vector.multi_reduction <add>, %44, %cst_20 [0] : vector<8x64xf32> to vector<64xf32>
    %46 = vector.shape_cast %45 : vector<64xf32> to vector<1x64xf32>
    %cst_21 = arith.constant 1.250000e-01 : f32
    %47 = vector.broadcast %cst_21 : f32 to vector<1x64xf32>
    %48 = arith.mulf %43, %47 : vector<1x64xf32>
    %cst_22 = arith.constant 1.250000e-01 : f32
    %49 = vector.broadcast %cst_22 : f32 to vector<1x64xf32>
    %50 = arith.mulf %46, %49 : vector<1x64xf32>
    %51 = arith.mulf %48, %48 : vector<1x64xf32>
    %52 = arith.subf %50, %51 : vector<1x64xf32>
    %cst_23 = arith.constant 0.000000e+00 : f32
    %53 = vector.broadcast %cst_23 : f32 to vector<1x64xf32>
    %54 = arith.maximumf %52, %53 : vector<1x64xf32>
    %c0_24 = arith.constant 0 : index
    %c512 = arith.constant 512 : index
    %55 = vector.load %arg5[%c0_24, %c512] : memref<1x2048xf32, #tpu.memory_space<vmem>>, vector<1x64xf32>
    %cst_25 = arith.constant 9.99999974E-6 : f32
    %56 = vector.broadcast %cst_25 : f32 to vector<1x64xf32>
    %57 = arith.addf %54, %56 : vector<1x64xf32>
    %58 = math.rsqrt %57 : vector<1x64xf32>
    %59 = arith.mulf %55, %58 : vector<1x64xf32>
    %c0_26 = arith.constant 0 : index
    %c640 = arith.constant 640 : index
    %60 = vector.load %arg5[%c0_26, %c640] : memref<1x2048xf32, #tpu.memory_space<vmem>>, vector<1x64xf32>
    %61 = arith.mulf %48, %59 : vector<1x64xf32>
    %62 = arith.subf %60, %61 : vector<1x64xf32>
    %63 = vector.broadcast %59 : vector<1x64xf32> to vector<8x64xf32>
    %64 = arith.mulf %41, %63 : vector<8x64xf32>
    %65 = vector.broadcast %62 : vector<1x64xf32> to vector<8x64xf32>
    %66 = arith.addf %64, %65 : vector<8x64xf32>
    %67 = arith.truncf %66 : vector<8x64xf32> to vector<8x64xbf16>
    %c0_27 = arith.constant 0 : index
    %c0_28 = arith.constant 0 : index
    %68 = vector.load %arg3[%c0_27, %c0_28] : memref<64x128xbf16, #tpu.memory_space<vmem>>, vector<64x128xbf16>
    %cst_29 = arith.constant dense<0.000000e+00> : vector<8x128xf32>
    %69 = tpu.matmul %67, %68, %cst_29 {dimension_numbers = #tpu.dot_dimension_numbers<[1], [0], [0], [1], [0, 0, 1, 1], [], []>} : vector<8x64xbf16>, vector<64x128xbf16>, vector<8x128xf32> -> vector<8x128xf32>
    %c0_30 = arith.constant 0 : index
    %c768 = arith.constant 768 : index
    %70 = vector.load %arg5[%c0_30, %c768] : memref<1x2048xf32, #tpu.memory_space<vmem>>, vector<1x128xf32>
    %71 = vector.broadcast %70 : vector<1x128xf32> to vector<8x128xf32>
    %72 = arith.addf %69, %71 : vector<8x128xf32>
    %cst_31 = arith.constant 0.000000e+00 : f32
    %73 = vector.broadcast %cst_31 : f32 to vector<8x128xf32>
    %74 = arith.maximumf %72, %73 : vector<8x128xf32>
    %cst_32 = arith.constant dense<0.000000e+00> : vector<128xf32>
    %75 = vector.multi_reduction <add>, %74, %cst_32 [0] : vector<8x128xf32> to vector<128xf32>
    %76 = vector.shape_cast %75 : vector<128xf32> to vector<1x128xf32>
    %77 = arith.mulf %74, %74 : vector<8x128xf32>
    %cst_33 = arith.constant dense<0.000000e+00> : vector<128xf32>
    %78 = vector.multi_reduction <add>, %77, %cst_33 [0] : vector<8x128xf32> to vector<128xf32>
    %79 = vector.shape_cast %78 : vector<128xf32> to vector<1x128xf32>
    %cst_34 = arith.constant 1.250000e-01 : f32
    %80 = vector.broadcast %cst_34 : f32 to vector<1x128xf32>
    %81 = arith.mulf %76, %80 : vector<1x128xf32>
    %cst_35 = arith.constant 1.250000e-01 : f32
    %82 = vector.broadcast %cst_35 : f32 to vector<1x128xf32>
    %83 = arith.mulf %79, %82 : vector<1x128xf32>
    %84 = arith.mulf %81, %81 : vector<1x128xf32>
    %85 = arith.subf %83, %84 : vector<1x128xf32>
    %cst_36 = arith.constant 0.000000e+00 : f32
    %86 = vector.broadcast %cst_36 : f32 to vector<1x128xf32>
    %87 = arith.maximumf %85, %86 : vector<1x128xf32>
    %c0_37 = arith.constant 0 : index
    %c896 = arith.constant 896 : index
    %88 = vector.load %arg5[%c0_37, %c896] : memref<1x2048xf32, #tpu.memory_space<vmem>>, vector<1x128xf32>
    %cst_38 = arith.constant 9.99999974E-6 : f32
    %89 = vector.broadcast %cst_38 : f32 to vector<1x128xf32>
    %90 = arith.addf %87, %89 : vector<1x128xf32>
    %91 = math.rsqrt %90 : vector<1x128xf32>
    %92 = arith.mulf %88, %91 : vector<1x128xf32>
    %c0_39 = arith.constant 0 : index
    %c1024 = arith.constant 1024 : index
    %93 = vector.load %arg5[%c0_39, %c1024] : memref<1x2048xf32, #tpu.memory_space<vmem>>, vector<1x128xf32>
    %94 = arith.mulf %81, %92 : vector<1x128xf32>
    %95 = arith.subf %93, %94 : vector<1x128xf32>
    %96 = vector.broadcast %92 : vector<1x128xf32> to vector<8x128xf32>
    %97 = arith.mulf %74, %96 : vector<8x128xf32>
    %98 = vector.broadcast %95 : vector<1x128xf32> to vector<8x128xf32>
    %99 = arith.addf %97, %98 : vector<8x128xf32>
    %100 = arith.truncf %99 : vector<8x128xf32> to vector<8x128xbf16>
    %c0_40 = arith.constant 0 : index
    %c0_41 = arith.constant 0 : index
    %101 = vector.load %arg4[%c0_40, %c0_41] : memref<128x896xbf16, #tpu.memory_space<vmem>>, vector<128x896xbf16>
    %cst_42 = arith.constant dense<0.000000e+00> : vector<8x896xf32>
    %102 = tpu.matmul %100, %101, %cst_42 {dimension_numbers = #tpu.dot_dimension_numbers<[1], [0], [0], [1], [0, 0, 1, 1], [], []>} : vector<8x128xbf16>, vector<128x896xbf16>, vector<8x896xf32> -> vector<8x896xf32>
    %c0_43 = arith.constant 0 : index
    %c1152 = arith.constant 1152 : index
    %103 = vector.load %arg5[%c0_43, %c1152] : memref<1x2048xf32, #tpu.memory_space<vmem>>, vector<1x896xf32>
    %104 = vector.broadcast %103 : vector<1x896xf32> to vector<8x896xf32>
    %105 = arith.addf %102, %104 : vector<8x896xf32>
    %cst_44 = arith.constant 0.000000e+00 : f32
    %106 = vector.broadcast %cst_44 : f32 to vector<8x896xf32>
    %107 = arith.subf %106, %105 : vector<8x896xf32>
    %108 = math.exp %107 : vector<8x896xf32>
    %cst_45 = arith.constant 1.000000e+00 : f32
    %109 = vector.broadcast %cst_45 : f32 to vector<8x896xf32>
    %110 = arith.addf %109, %108 : vector<8x896xf32>
    %111 = tpu.reciprocal %110 {approx = true} : vector<8x896xf32> -> vector<8x896xf32>
    %c0_46 = arith.constant 0 : index
    %c0_47 = arith.constant 0 : index
    %112 = vector.load %arg6[%c0_46, %c0_47] : memref<8x896xf32, #tpu.memory_space<vmem>>, vector<8x896xf32>
    tpu.vector_store %arg6[%c0_46, %c0_47], %111 {strides = array<i32>} : memref<8x896xf32, #tpu.memory_space<vmem>>, vector<8x896xf32>,
    return
  }
}

</mosaic_0001>

<llo_original>
// kernel: decoder_forward.1
$region0: #{decoder_forward.1}
  #allocation0 [shape = 'u32[]', space=smem, size = 0x4, offset = 0x4, fixed_abs, tag = 'smem constant byte address 0x4 - core index']
  #allocation1 [shape = 'u32[144,128]{1,0:T(1,128)}', space=vmem, size = 0x12000, scoped, tag = 'internal scratch']
  %s0 = inlined_call_operand.hbm [shape: f32[8,16], index: 0, kind: input, shape index: {}]
  %s1 = inlined_call_operand.hbm [shape: bf16[16,32], index: 1, kind: input, shape index: {}]
  %s2 = inlined_call_operand.hbm [shape: bf16[32,64], index: 2, kind: input, shape index: {}]
  %s3 = inlined_call_operand.hbm [shape: bf16[64,128], index: 3, kind: input, shape index: {}]
  %s4 = inlined_call_operand.hbm [shape: bf16[128,896], index: 4, kind: input, shape index: {}]
  %s5 = inlined_call_operand.vmem [shape: f32[1,2048], index: 5, kind: input, shape index: {}]
  %s6 = inlined_call_operand.hbm [shape: f32[8,896], index: 6, kind: output, shape index: {}]
  %s7 = sld [smem:[#allocation0]]
  $region54: #{decoder_forward.1} parent=0
    _
  %s9 = ssub.s32 1, %s7
  %s10 = scalar_select 0, %s9, %s7
  $region1: #{decoder_forward.1} parent=0
    #allocation2 [shape = 'u8[4096]{0}', space=vmem, size = 0x1000, scoped, tag = 'input window, operand 0, single buffered']
    #allocation3 [shape = 's32[1]{0}', space=sflag, size = 0x4, scoped, tag = 'scoped memory for decoder_forward.1']
    #allocation4 [shape = 's32[1]{0}', space=sflag, size = 0x4, scoped, tag = 'scoped memory for decoder_forward.1']
    #allocation5 [shape = 'u8[4096]{0}', space=vmem, size = 0x1000, scoped, tag = 'input window, operand 1, single buffered']
    #allocation6 [shape = 's32[1]{0}', space=sflag, size = 0x4, scoped, tag = 'scoped memory for decoder_forward.1']
    #allocation7 [shape = 'u8[8192]{0}', space=vmem, size = 0x2000, scoped, tag = 'input window, operand 2, single buffered']
    #allocation8 [shape = 'u8[16384]{0}', space=vmem, size = 0x4000, scoped, tag = 'input window, operand 3, single buffered']
    #allocation9 [shape = 's32[1]{0}', space=sflag, size = 0x4, scoped, tag = 'scoped memory for decoder_forward.1']
    #allocation10 [shape = 'u8[229376]{0}', space=vmem, size = 0x38000, scoped, tag = 'input window, operand 4, single buffered']
    #allocation11 [shape = 'u8[28672]{0}', space=vmem, size = 0x7000, scoped, tag = 'output window, operand 0, single buffered']
    %11 = vsyncpa [#allocation3], 0
    %12 = vsyncpa [#allocation6], 0
    %13 = vsyncpa [#allocation9], 0
    %14 = vsyncpa [#allocation4], 0
    // Predicated region
    $region2: #{decoder_forward.1} parent=1 // pred_check
      _
    $region3: #{decoder_forward.1} parent=1 // pred_check_branch
      %16 = sbr.rel (0) target = $region5
    $region4: #{decoder_forward.1} parent=1 // pred_region
      %s18 = ssub.s32 128, 128
      %19 = vsyncadd [#allocation3], %s18
      %s21 = sshll.u32 [#allocation2], 4
      %s22 = int_to_ptr.vmem [resolvable:$true] %s21
      %24 = dma.hbm_to_vmem [thread:$0]  %s0, 128, %s22, [#allocation3]
    $region5: #{decoder_forward.1} parent=1 // pred_fallthru
      _
    // Predicated region
    $region6: #{decoder_forward.1} parent=1 // pred_check
      _
    $region7: #{decoder_forward.1} parent=1 // pred_check_branch
      %26 = sbr.rel (0) target = $region9
    $region8: #{decoder_forward.1} parent=1 // pred_region
      %s28 = ssub.s32 128, 128
      %29 = vsyncadd [#allocation6], %s28
      %s30 = sshll.u32 [#allocation5], 4
      %s31 = int_to_ptr.vmem [resolvable:$true] %s30
      %36 = dma.hbm_to_vmem [thread:$0]  %s1, 128, %s31, [#allocation6], 64, 64, 4
    $region9: #{decoder_forward.1} parent=1 // pred_fallthru
      _
    // Predicated region
    $region10: #{decoder_forward.1} parent=1 // pred_check
      _
    $region11: #{decoder_forward.1} parent=1 // pred_check_branch
      %38 = sbr.rel (0) target = $region13
    $region12: #{decoder_forward.1} parent=1 // pred_region
      %s40 = ssub.s32 256, 256
      %41 = vsyncadd [#allocation6], %s40
      %s42 = sshll.u32 [#allocation7], 4
      %s43 = int_to_ptr.vmem [resolvable:$true] %s42
      %48 = dma.hbm_to_vmem [thread:$0]  %s2, 256, %s43, [#allocation6], 64, 64, 4
    $region13: #{decoder_forward.1} parent=1 // pred_fallthru
      _
    // Predicated region
    $region14: #{decoder_forward.1} parent=1 // pred_check
      _
    $region15: #{decoder_forward.1} parent=1 // pred_check_branch
      %50 = sbr.rel (0) target = $region17
    $region16: #{decoder_forward.1} parent=1 // pred_region
      %s52 = ssub.s32 512, 512
      %53 = vsyncadd [#allocation9], %s52
      %s54 = sshll.u32 [#allocation8], 4
      %s55 = int_to_ptr.vmem [resolvable:$true] %s54
      %60 = dma.hbm_to_vmem [thread:$0]  %s3, 512, %s55, [#allocation9], 64, 64, 4
    $region17: #{decoder_forward.1} parent=1 // pred_fallthru
      _
    // Predicated region
    $region18: #{decoder_forward.1} parent=1 // pred_check
      _
    $region19: #{decoder_forward.1} parent=1 // pred_check_branch
      %62 = sbr.rel (0) target = $region21
    $region20: #{decoder_forward.1} parent=1 // pred_region
      %s64 = ssub.s32 7168, 7168
      %65 = vsyncadd [#allocation9], %s64
      %s66 = sshll.u32 [#allocation10], 4
      %s67 = int_to_ptr.vmem [resolvable:$true] %s66
      %72 = dma.hbm_to_vmem [thread:$0]  %s4, 7168, %s67, [#allocation9], 448, 448, 28
    $region21: #{decoder_forward.1} parent=1 // pred_fallthru
      _
    // Predicated region
    $region22: #{decoder_forward.1} parent=1 // pred_check
      _
    $region23: #{decoder_forward.1} parent=1 // pred_check_branch
      %74 = sbr.rel (0) target = $region25
    $region24: #{decoder_forward.1} parent=1 // pred_region
      _
    $region25: #{decoder_forward.1} parent=1 // pred_fallthru
      _
    // Predicated region
    $region26: #{decoder_forward.1} parent=1 // pred_check
      _
    $region27: #{decoder_forward.1} parent=1 // pred_check_branch
      %76 = sbr.rel (0) target = $region29
    $region28: #{decoder_forward.1} parent=1 // pred_region
      %77 = dma.done [#allocation3], 128
    $region29: #{decoder_forward.1} parent=1 // pred_fallthru
      _
    // Predicated region
    $region30: #{decoder_forward.1} parent=1 // pred_check
      _
    $region31: #{decoder_forward.1} parent=1 // pred_check_branch
      %79 = sbr.rel (0) target = $region33
    $region32: #{decoder_forward.1} parent=1 // pred_region
      %80 = dma.done [#allocation6], 128
    $region33: #{decoder_forward.1} parent=1 // pred_fallthru
      _
    // Predicated region
    $region34: #{decoder_forward.1} parent=1 // pred_check
      _
    $region35: #{decoder_forward.1} parent=1 // pred_check_branch
      %82 = sbr.rel (0) target = $region37
    $region36: #{decoder_forward.1} parent=1 // pred_region
      %83 = dma.done [#allocation6], 256
    $region37: #{decoder_forward.1} parent=1 // pred_fallthru
      _
    // Predicated region
    $region38: #{decoder_forward.1} parent=1 // pred_check
      _
    $region39: #{decoder_forward.1} parent=1 // pred_check_branch
      %85 = sbr.rel (0) target = $region41
    $region40: #{decoder_forward.1} parent=1 // pred_region
      %86 = dma.done [#allocation9], 512
    $region41: #{decoder_forward.1} parent=1 // pred_fallthru
      _
    // Predicated region
    $region42: #{decoder_forward.1} parent=1 // pred_check
      _
    $region43: #{decoder_forward.1} parent=1 // pred_check_branch
      %88 = sbr.rel (0) target = $region45
    $region44: #{decoder_forward.1} parent=1 // pred_region
      %89 = dma.done [#allocation9], 7168
    $region45: #{decoder_forward.1} parent=1 // pred_fallthru
      _
    %v91 = vld [vmem:[#allocation2] sm:$0xff]
    %v92 = vpack.c.bf16 %v91, %v91
    %v93 = vld [vmem:[#allocation5] sm:$0xf]
    %v94 = vld [vmem:[#allocation5 + $0x4] sm:$0xf]
    %v95 = vld [vmem:[%s5] sm:$0x1]
    %v97 = vlaneseq
    %v98 = vshrl.u32 %v97, 7
    %v99 = vsub.s32 0, %v98
    %v100 = vrot.slane %v95, %v99
    %v104 = vunpack.c.l.b16 %v93
    %v105 = vunpack.c.l.b16 %v94
    %v106 = vpack.c.b16 %v105, %v104
    %vm108 = vcmask 130048
    %v110 = vsel %vm108, %v92, 0
    %112 = vmatprep.subr.bf16.mxu0 0
    %113 = vmatpush1.bf16.msra.mxu0 %v106
    %114 = vmatprep.subr.bf16.mxu0 0
    %115 = vmatpush1.bf16.msra.mxu0 0
    %116 = vmatprep.subr.bf16.mxu0 0
    %117 = vmatpush1.bf16.msra.mxu0 0
    %118 = vmatprep.subr.bf16.mxu0 0
    %119 = vmatpush1.bf16.msra.mxu0 0
    %120 = vmatprep.subr.bf16.mxu0 0
    %121 = vmatpush1.bf16.msra.mxu0 0
    %122 = vmatprep.subr.bf16.mxu0 0
    %123 = vmatpush1.bf16.msra.mxu0 0
    %124 = vmatprep.subr.bf16.mxu0 0
    %125 = vmatpush1.bf16.msra.mxu0 0
    %126 = vmatprep.subr.bf16.mxu0 0
    %127 = vmatpush1.bf16.msra.mxu0 0
    %128 = vmatprep.subr.bf16.mxu0 0
    %129 = vmatpush1.bf16.msra.mxu0 0
    %130 = vmatprep.subr.bf16.mxu0 0
    %131 = vmatpush1.bf16.msra.mxu0 0
    %132 = vmatprep.subr.bf16.mxu0 0
    %133 = vmatpush1.bf16.msra.mxu0 0
    %134 = vmatprep.subr.bf16.mxu0 0
    %135 = vmatpush1.bf16.msra.mxu0 0
    %136 = vmatprep.subr.bf16.mxu0 0
    %137 = vmatpush1.bf16.msra.mxu0 0
    %138 = vmatprep.subr.bf16.mxu0 0
    %139 = vmatpush1.bf16.msra.mxu0 0
    %140 = vmatprep.subr.bf16.mxu0 0
    %141 = vmatpush1.bf16.msra.mxu0 0
    %142 = vmatprep.subr.bf16.mxu0 0
    %143 = vmatpush1.bf16.msra.mxu0 0
    %144 = vmatprep.mubr.bf16.mxu0 0
    %145 = vmatmul.mubr.bf16.gmra.mrb[0].mxu0 %v110
    %v146 = vpop.f32.mrb[0].mxu0
    %v147 = vadd.f32 %v100, %v146
    %v148 = vpop.f32.mrb[0].mxu0
    %v149 = vpop.f32.mrb[0].mxu0
    %v150 = vpop.f32.mrb[0].mxu0
    %151 = vdwg.mxu0
    %v152 = vmax.f32 %v147, 0.0
    %vm153 = vcmask 261120
    %v154 = vsel %vm153, %v152, 0.0
    %v155 = vrot.slane %v154, 4
    %v156 = vadd.f32 %v154, %v155
    %v157 = vrot.slane %v156, 2
    %v158 = vadd.f32 %v156, %v157
    %v159 = vrot.slane %v158, 1
    %v160 = vadd.f32 %v158, %v159
    %v161 = vmul.f32 %v152, %v152
    %v162 = vsel %vm153, %v161, 0.0
    %v163 = vrot.slane %v162, 4
    %v164 = vadd.f32 %v162, %v163
    %v165 = vrot.slane %v164, 2
    %v166 = vadd.f32 %v164, %v165
    %v167 = vrot.slane %v166, 1
    %v168 = vadd.f32 %v166, %v167
    %v169 = vmul.f32 %v160, 0.125
    %v170 = vmul.f32 %v168, 0.125
    %v171 = vmul.f32 %v169, %v169
    %v172 = vsub.f32 %v170, %v171
    %v173 = vmax.f32 %v172, 0.0
    %v174 = vld [vmem:[%s5 + $0x1] sm:$0x1]
    %v175 = vadd.f32 %v173, 1e-05
    %v176 = vrsqrt.pop %v175
    %v177 = vmul.f32 %v174, %v176
    %v178 = vld [vmem:[%s5 + $0x2] sm:$0x1]
    %v179 = vmul.f32 %v169, %v177
    %v180 = vsub.f32 %v178, %v179
    %v182 = vlaneseq
    %v183 = vshrl.u32 %v182, 7
    %v184 = vsub.s32 0, %v183
    %v185 = vrot.slane %v177, %v184
    %v187 = vmul.f32 %v152, %v185
    %v189 = vlaneseq
    %v190 = vshrl.u32 %v189, 7
    %v191 = vsub.s32 0, %v190
    %v192 = vrot.slane %v180, %v191
    %v194 = vadd.f32 %v187, %v192
    %v195 = vpack.c.bf16 %v194, %v194
    %v196 = vld [vmem:[#allocation7] sm:$0xf]
    %v197 = vld [vmem:[#allocation7 + $0x4] sm:$0xf]
    %v198 = vld [vmem:[#allocation7 + $0x8] sm:$0xf]
    %v199 = vld [vmem:[#allocation7 + $0xc] sm:$0xf]
    %v200 = vld [vmem:[%s5 + $0x3] sm:$0x1]
    %v202 = vlaneseq
    %v203 = vshrl.u32 %v202, 7
    %v204 = vsub.s32 0, %v203
    %v205 = vrot.slane %v200, %v204
    %v211 = vunpack.c.l.b16 %v196
    %v212 = vunpack.c.l.b16 %v197
    %v213 = vunpack.c.l.b16 %v198
    %v214 = vunpack.c.l.b16 %v199
    %v215 = vpack.c.b16 %v212, %v211
    %v216 = vpack.c.b16 %v214, %v213
    %v220 = vsel %vm153, %v195, 0
    %222 = vmatprep.subr.bf16.mxu0 0
    %223 = vmatpush1.bf16.msra.mxu0 %v215
    %224 = vmatprep.subr.bf16.mxu0 0
    %225 = vmatpush1.bf16.msra.mxu0 %v216
    %226 = vmatprep.subr.bf16.mxu0 0
    %227 = vmatpush1.bf16.msra.mxu0 0
    %228 = vmatprep.subr.bf16.mxu0 0
    %229 = vmatpush1.bf16.msra.mxu0 0
    %230 = vmatprep.subr.bf16.mxu0 0
    %231 = vmatpush1.bf16.msra.mxu0 0
    %232 = vmatprep.subr.bf16.mxu0 0
    %233 = vmatpush1.bf16.msra.mxu0 0
    %234 = vmatprep.subr.bf16.mxu0 0
    %235 = vmatpush1.bf16.msra.mxu0 0
    %236 = vmatprep.subr.bf16.mxu0 0
    %237 = vmatpush1.bf16.msra.mxu0 0
    %238 = vmatprep.subr.bf16.mxu0 0
    %239 = vmatpush1.bf16.msra.mxu0 0
    %240 = vmatprep.subr.bf16.mxu0 0
    %241 = vmatpush1.bf16.msra.mxu0 0
    %242 = vmatprep.subr.bf16.mxu0 0
    %243 = vmatpush1.bf16.msra.mxu0 0
    %244 = vmatprep.subr.bf16.mxu0 0
    %245 = vmatpush1.bf16.msra.mxu0 0
    %246 = vmatprep.subr.bf16.mxu0 0
    %247 = vmatpush1.bf16.msra.mxu0 0
    %248 = vmatprep.subr.bf16.mxu0 0
    %249 = vmatpush1.bf16.msra.mxu0 0
    %250 = vmatprep.subr.bf16.mxu0 0
    %251 = vmatpush1.bf16.msra.mxu0 0
    %252 = vmatprep.subr.bf16.mxu0 0
    %253 = vmatpush1.bf16.msra.mxu0 0
    %254 = vmatprep.mubr.bf16.mxu0 0
    %255 = vmatmul.mubr.bf16.gmra.mrb[0].mxu0 %v220
    %v256 = vpop.f32.mrb[0].mxu0
    %v257 = vadd.f32 %v205, %v256
    %v258 = vpop.f32.mrb[0].mxu0
    %v259 = vpop.f32.mrb[0].mxu0
    %v260 = vpop.f32.mrb[0].mxu0
    %261 = vdwg.mxu0
    %v262 = vmax.f32 %v257, 0.0
    %vm263 = vcmask 523264
    %v264 = vsel %vm263, %v262, 0.0
    %v265 = vrot.slane %v264, 4
    %v266 = vadd.f32 %v264, %v265
    %v267 = vrot.slane %v266, 2
    %v268 = vadd.f32 %v266, %v267
    %v269 = vrot.slane %v268, 1
    %v270 = vadd.f32 %v268, %v269
    %v271 = vmul.f32 %v262, %v262
    %v272 = vsel %vm263, %v271, 0.0
    %v273 = vrot.slane %v272, 4
    %v274 = vadd.f32 %v272, %v273
    %v275 = vrot.slane %v274, 2
    %v276 = vadd.f32 %v274, %v275
    %v277 = vrot.slane %v276, 1
    %v278 = vadd.f32 %v276, %v277
    %v279 = vmul.f32 %v270, 0.125
    %v280 = vmul.f32 %v278, 0.125
    %v281 = vmul.f32 %v279, %v279
    %v282 = vsub.f32 %v280, %v281
    %v283 = vmax.f32 %v282, 0.0
    %v284 = vld [vmem:[%s5 + $0x4] sm:$0x1]
    %v285 = vadd.f32 %v283, 1e-05
    %v286 = vrsqrt.pop %v285
    %v287 = vmul.f32 %v284, %v286
    %v288 = vld [vmem:[%s5 + $0x5] sm:$0x1]
    %v289 = vmul.f32 %v279, %v287
    %v290 = vsub.f32 %v288, %v289
    %v292 = vlaneseq
    %v293 = vshrl.u32 %v292, 7
    %v294 = vsub.s32 0, %v293
    %v295 = vrot.slane %v287, %v294
    %v297 = vmul.f32 %v262, %v295
    %v299 = vlaneseq
    %v300 = vshrl.u32 %v299, 7
    %v301 = vsub.s32 0, %v300
    %v302 = vrot.slane %v290, %v301
    %v304 = vadd.f32 %v297, %v302
    %v305 = vpack.c.bf16 %v304, %v304
    %v306 = vld [vmem:[#allocation8] sm:$0xf]
    %v307 = vld [vmem:[#allocation8 + $0x4] sm:$0xf]
    %v308 = vld [vmem:[#allocation8 + $0x8] sm:$0xf]
    %v309 = vld [vmem:[#allocation8 + $0xc] sm:$0xf]
    %v310 = vld [vmem:[#allocation8 + $0x10] sm:$0xf]
    %v311 = vld [vmem:[#allocation8 + $0x14] sm:$0xf]
    %v312 = vld [vmem:[#allocation8 + $0x18] sm:$0xf]
    %v313 = vld [vmem:[#allocation8 + $0x1c] sm:$0xf]
    %v314 = vld [vmem:[%s5 + $0x6] sm:$0x1]
    %v316 = vlaneseq
    %v317 = vshrl.u32 %v316, 7
    %v318 = vsub.s32 0, %v317
    %v319 = vrot.slane %v314, %v318
    %v329 = vunpack.c.l.b16 %v306
    %v330 = vunpack.c.l.b16 %v307
    %v331 = vunpack.c.l.b16 %v308
    %v332 = vunpack.c.l.b16 %v309
    %v333 = vunpack.c.l.b16 %v310
    %v334 = vunpack.c.l.b16 %v311
    %v335 = vunpack.c.l.b16 %v312
    %v336 = vunpack.c.l.b16 %v313
    %v337 = vpack.c.b16 %v330, %v329
    %v338 = vpack.c.b16 %v332, %v331
    %v339 = vpack.c.b16 %v334, %v333
    %v340 = vpack.c.b16 %v336, %v335
    %v346 = vsel %vm263, %v305, 0
    %348 = vmatprep.subr.bf16.mxu0 0
    %349 = vmatpush1.bf16.msra.mxu0 %v337
    %350 = vmatprep.subr.bf16.mxu0 0
    %351 = vmatpush1.bf16.msra.mxu0 %v338
    %352 = vmatprep.subr.bf16.mxu0 0
    %353 = vmatpush1.bf16.msra.mxu0 %v339
    %354 = vmatprep.subr.bf16.mxu0 0
    %355 = vmatpush1.bf16.msra.mxu0 %v340
    %356 = vmatprep.subr.bf16.mxu0 0
    %357 = vmatpush1.bf16.msra.mxu0 0
    %358 = vmatprep.subr.bf16.mxu0 0
    %359 = vmatpush1.bf16.msra.mxu0 0
    %360 = vmatprep.subr.bf16.mxu0 0
    %361 = vmatpush1.bf16.msra.mxu0 0
    %362 = vmatprep.subr.bf16.mxu0 0
    %363 = vmatpush1.bf16.msra.mxu0 0
    %364 = vmatprep.subr.bf16.mxu0 0
    %365 = vmatpush1.bf16.msra.mxu0 0
    %366 = vmatprep.subr.bf16.mxu0 0
    %367 = vmatpush1.bf16.msra.mxu0 0
    %368 = vmatprep.subr.bf16.mxu0 0
    %369 = vmatpush1.bf16.msra.mxu0 0
    %370 = vmatprep.subr.bf16.mxu0 0
    %371 = vmatpush1.bf16.msra.mxu0 0
    %372 = vmatprep.subr.bf16.mxu0 0
    %373 = vmatpush1.bf16.msra.mxu0 0
    %374 = vmatprep.subr.bf16.mxu0 0
    %375 = vmatpush1.bf16.msra.mxu0 0
    %376 = vmatprep.subr.bf16.mxu0 0
    %377 = vmatpush1.bf16.msra.mxu0 0
    %378 = vmatprep.subr.bf16.mxu0 0
    %379 = vmatpush1.bf16.msra.mxu0 0
    %380 = vmatprep.mubr.bf16.mxu0 0
    %381 = vmatmul.mubr.bf16.gmra.mrb[0].mxu0 %v346
    %v382 = vpop.f32.mrb[0].mxu0
    %v383 = vadd.f32 %v319, %v382
    %v384 = vpop.f32.mrb[0].mxu0
    %v385 = vpop.f32.mrb[0].mxu0
    %v386 = vpop.f32.mrb[0].mxu0
    %387 = vdwg.mxu0
    %v388 = vmax.f32 %v383, 0.0
    %v389 = vrot.slane %v388, 4
    %v390 = vadd.f32 %v388, %v389
    %v391 = vrot.slane %v390, 2
    %v392 = vadd.f32 %v390, %v391
    %v393 = vrot.slane %v392, 1
    %v394 = vadd.f32 %v392, %v393
    %v395 = vmul.f32 %v388, %v388
    %v396 = vrot.slane %v395, 4
    %v397 = vadd.f32 %v395, %v396
    %v398 = vrot.slane %v397, 2
    %v399 = vadd.f32 %v397, %v398
    %v400 = vrot.slane %v399, 1
    %v401 = vadd.f32 %v399, %v400
    %v402 = vmul.f32 %v394, 0.125
    %v403 = vmul.f32 %v401, 0.125
    %v404 = vmul.f32 %v402, %v402
    %v405 = vsub.f32 %v403, %v404
    %v406 = vmax.f32 %v405, 0.0
    %v407 = vld [vmem:[%s5 + $0x7] sm:$0x1]
    %v408 = vadd.f32 %v406, 1e-05
    %v409 = vrsqrt.pop %v408
    %v410 = vmul.f32 %v407, %v409
    %v411 = vld [vmem:[%s5 + $0x8] sm:$0x1]
    %v412 = vmul.f32 %v402, %v410
    %v413 = vsub.f32 %v411, %v412
    %v415 = vlaneseq
    %v416 = vshrl.u32 %v415, 7
    %v417 = vsub.s32 0, %v416
    %v418 = vrot.slane %v410, %v417
    %v420 = vmul.f32 %v388, %v418
    %v422 = vlaneseq
    %v423 = vshrl.u32 %v422, 7
    %v424 = vsub.s32 0, %v423
    %v425 = vrot.slane %v413, %v424
    %v427 = vadd.f32 %v420, %v425
    %v428 = vpack.c.bf16 %v427, %v427
    %v429 = vld [vmem:[#allocation10] sm:$0xff]
    %v430 = vld [vmem:[#allocation10 + $0x8] sm:$0xff]
    %v431 = vld [vmem:[#allocation10 + $0x10] sm:$0xff]
    %v432 = vld [vmem:[#allocation10 + $0x18] sm:$0xf]
    %v433 = vld [vmem:[#allocation10 + $0x1c] sm:$0xff]
    %v434 = vld [vmem:[#allocation10 + $0x24] sm:$0xff]
    %v435 = vld [vmem:[#allocation10 + $0x2c] sm:$0xff]
    %v436 = vld [vmem:[#allocation10 + $0x34] sm:$0xf]
    %v437 = vld [vmem:[#allocation10 + $0x38] sm:$0xff]
    %v438 = vld [vmem:[#allocation10 + $0x40] sm:$0xff]
    %v439 = vld [vmem:[#allocation10 + $0x48] sm:$0xff]
    %v440 = vld [vmem:[#allocation10 + $0x50] sm:$0xf]
    %v441 = vld [vmem:[#allocation10 + $0x54] sm:$0xff]
    %v442 = vld [vmem:[#allocation10 + $0x5c] sm:$0xff]
    %v443 = vld [vmem:[#allocation10 + $0x64] sm:$0xff]
    %v444 = vld [vmem:[#allocation10 + $0x6c] sm:$0xf]
    %v445 = vld [vmem:[#allocation10 + $0x70] sm:$0xff]
    %v446 = vld [vmem:[#allocation10 + $0x78] sm:$0xff]
    %v447 = vld [vmem:[#allocation10 + $0x80] sm:$0xff]
    %v448 = vld [vmem:[#allocation10 + $0x88] sm:$0xf]
    %v449 = vld [vmem:[#allocation10 + $0x8c] sm:$0xff]
    %v450 = vld [vmem:[#allocation10 + $0x94] sm:$0xff]
    %v451 = vld [vmem:[#allocation10 + $0x9c] sm:$0xff]
    %v452 = vld [vmem:[#allocation10 + $0xa4] sm:$0xf]
    %v453 = vld [vmem:[#allocation10 + $0xa8] sm:$0xff]
    %v454 = vld [vmem:[#allocation10 + $0xb0] sm:$0xff]
    %v455 = vld [vmem:[#allocation10 + $0xb8] sm:$0xff]
    %v456 = vld [vmem:[#allocation10 + $0xc0] sm:$0xf]
    %v457 = vld [vmem:[#allocation10 + $0xc4] sm:$0xff]
    %v458 = vld [vmem:[#allocation10 + $0xcc] sm:$0xff]
    %v459 = vld [vmem:[#allocation10 + $0xd4] sm:$0xff]
    %v460 = vld [vmem:[#allocation10 + $0xdc] sm:$0xf]
    %v461 = vld [vmem:[#allocation10 + $0xe0] sm:$0xff]
    %v462 = vld [vmem:[#allocation10 + $0xe8] sm:$0xff]
    %v463 = vld [vmem:[#allocation10 + $0xf0] sm:$0xff]
    %v464 = vld [vmem:[#allocation10 + $0xf8] sm:$0xf]
    %v465 = vld [vmem:[#allocation10 + $0xfc] sm:$0xff]
    %v466 = vld [vmem:[#allocation10 + $0x104] sm:$0xff]
    %v467 = vld [vmem:[#allocation10 + $0x10c] sm:$0xff]
    %v468 = vld [vmem:[#allocation10 + $0x114] sm:$0xf]
    %v469 = vld [vmem:[#allocation10 + $0x118] sm:$0xff]
    %v470 = vld [vmem:[#allocation10 + $0x120] sm:$0xff]
    %v471 = vld [vmem:[#allocation10 + $0x128] sm:$0xff]
    %v472 = vld [vmem:[#allocation10 + $0x130] sm:$0xf]
    %v473 = vld [vmem:[#allocation10 + $0x134] sm:$0xff]
    %v474 = vld [vmem:[#allocation10 + $0x13c] sm:$0xff]
    %v475 = vld [vmem:[#allocation10 + $0x144] sm:$0xff]
    %v476 = vld [vmem:[#allocation10 + $0x14c] sm:$0xf]
    %v477 = vld [vmem:[#allocation10 + $0x150] sm:$0xff]
    %v478 = vld [vmem:[#allocation10 + $0x158] sm:$0xff]
    %v479 = vld [vmem:[#allocation10 + $0x160] sm:$0xff]
    %v480 = vld [vmem:[#allocation10 + $0x168] sm:$0xf]
    %v481 = vld [vmem:[#allocation10 + $0x16c] sm:$0xff]
    %v482 = vld [vmem:[#allocation10 + $0x174] sm:$0xff]
    %v483 = vld [vmem:[#allocation10 + $0x17c] sm:$0xff]
    %v484 = vld [vmem:[#allocation10 + $0x184] sm:$0xf]
    %v485 = vld [vmem:[#allocation10 + $0x188] sm:$0xff]
    %v486 = vld [vmem:[#allocation10 + $0x190] sm:$0xff]
    %v487 = vld [vmem:[#allocation10 + $0x198] sm:$0xff]
    %v488 = vld [vmem:[#allocation10 + $0x1a0] sm:$0xf]
    %v489 = vld [vmem:[#allocation10 + $0x1a4] sm:$0xff]
    %v490 = vld [vmem:[#allocation10 + $0x1ac] sm:$0xff]
    %v491 = vld [vmem:[#allocation10 + $0x1b4] sm:$0xff]
    %v492 = vld [vmem:[#allocation10 + $0x1bc] sm:$0xf]
    %v493 = vld [vmem:[%s5 + $0x9] sm:$0xff]
    %v495 = vlaneseq
    %v496 = vshrl.u32 %v495, 7
    %v497 = vsub.s32 0, %v496
    %v498 = vrot.slane %v493, %v497
    %v499 = vlaneseq
    %v500 = vshrl.u32 %v499, 7
    %v501 = vsub.s32 1, %v500
    %v502 = vrot.slane %v493, %v501
    %v503 = vlaneseq
    %v504 = vshrl.u32 %v503, 7
    %v505 = vsub.s32 2, %v504
    %v506 = vrot.slane %v493, %v505
    %v507 = vlaneseq
    %v508 = vshrl.u32 %v507, 7
    %v509 = vsub.s32 3, %v508
    %v510 = vrot.slane %v493, %v509
    %v511 = vlaneseq
    %v512 = vshrl.u32 %v511, 7
    %v513 = vsub.s32 4, %v512
    %v514 = vrot.slane %v493, %v513
    %v515 = vlaneseq
    %v516 = vshrl.u32 %v515, 7
    %v517 = vsub.s32 5, %v516
    %v518 = vrot.slane %v493, %v517
    %v519 = vlaneseq
    %v520 = vshrl.u32 %v519, 7
    %v521 = vsub.s32 6, %v520
    %v522 = vrot.slane %v493, %v521
    %v594 = vunpack.c.l.b16 %v429
    %v595 = vunpack.c.h.b16 %v429
    %v596 = vunpack.c.l.b16 %v430
    %v597 = vunpack.c.h.b16 %v430
    %v598 = vunpack.c.l.b16 %v431
    %v599 = vunpack.c.h.b16 %v431
    %v600 = vunpack.c.l.b16 %v432
    %v601 = vunpack.c.l.b16 %v433
    %v602 = vunpack.c.h.b16 %v433
    %v603 = vunpack.c.l.b16 %v434
    %v604 = vunpack.c.h.b16 %v434
    %v605 = vunpack.c.l.b16 %v435
    %v606 = vunpack.c.h.b16 %v435
    %v607 = vunpack.c.l.b16 %v436
    %v608 = vunpack.c.l.b16 %v437
    %v609 = vunpack.c.h.b16 %v437
    %v610 = vunpack.c.l.b16 %v438
    %v611 = vunpack.c.h.b16 %v438
    %v612 = vunpack.c.l.b16 %v439
    %v613 = vunpack.c.h.b16 %v439
    %v614 = vunpack.c.l.b16 %v440
    %v615 = vunpack.c.l.b16 %v441
    %v616 = vunpack.c.h.b16 %v441
    %v617 = vunpack.c.l.b16 %v442
    %v618 = vunpack.c.h.b16 %v442
    %v619 = vunpack.c.l.b16 %v443
    %v620 = vunpack.c.h.b16 %v443
    %v621 = vunpack.c.l.b16 %v444
    %v622 = vunpack.c.l.b16 %v445
    %v623 = vunpack.c.h.b16 %v445
    %v624 = vunpack.c.l.b16 %v446
    %v625 = vunpack.c.h.b16 %v446
    %v626 = vunpack.c.l.b16 %v447
    %v627 = vunpack.c.h.b16 %v447
    %v628 = vunpack.c.l.b16 %v448
    %v629 = vunpack.c.l.b16 %v449
    %v630 = vunpack.c.h.b16 %v449
    %v631 = vunpack.c.l.b16 %v450
    %v632 = vunpack.c.h.b16 %v450
    %v633 = vunpack.c.l.b16 %v451
    %v634 = vunpack.c.h.b16 %v451
    %v635 = vunpack.c.l.b16 %v452
    %v636 = vunpack.c.l.b16 %v453
    %v637 = vunpack.c.h.b16 %v453
    %v638 = vunpack.c.l.b16 %v454
    %v639 = vunpack.c.h.b16 %v454
    %v640 = vunpack.c.l.b16 %v455
    %v641 = vunpack.c.h.b16 %v455
    %v642 = vunpack.c.l.b16 %v456
    %v643 = vunpack.c.l.b16 %v457
    %v644 = vunpack.c.h.b16 %v457
    %v645 = vunpack.c.l.b16 %v458
    %v646 = vunpack.c.h.b16 %v458
    %v647 = vunpack.c.l.b16 %v459
    %v648 = vunpack.c.h.b16 %v459
    %v649 = vunpack.c.l.b16 %v460
    %v650 = vunpack.c.l.b16 %v461
    %v651 = vunpack.c.h.b16 %v461
    %v652 = vunpack.c.l.b16 %v462
    %v653 = vunpack.c.h.b16 %v462
    %v654 = vunpack.c.l.b16 %v463
    %v655 = vunpack.c.h.b16 %v463
    %v656 = vunpack.c.l.b16 %v464
    %v657 = vunpack.c.l.b16 %v465
    %v658 = vunpack.c.h.b16 %v465
    %v659 = vunpack.c.l.b16 %v466
    %v660 = vunpack.c.h.b16 %v466
    %v661 = vunpack.c.l.b16 %v467
    %v662 = vunpack.c.h.b16 %v467
    %v663 = vunpack.c.l.b16 %v468
    %v664 = vunpack.c.l.b16 %v469
    %v665 = vunpack.c.h.b16 %v469
    %v666 = vunpack.c.l.b16 %v470
    %v667 = vunpack.c.h.b16 %v470
    %v668 = vunpack.c.l.b16 %v471
    %v669 = vunpack.c.h.b16 %v471
    %v670 = vunpack.c.l.b16 %v472
    %v671 = vunpack.c.l.b16 %v473
    %v672 = vunpack.c.h.b16 %v473
    %v673 = vunpack.c.l.b16 %v474
    %v674 = vunpack.c.h.b16 %v474
    %v675 = vunpack.c.l.b16 %v475
    %v676 = vunpack.c.h.b16 %v475
    %v677 = vunpack.c.l.b16 %v476
    %v678 = vunpack.c.l.b16 %v477
    %v679 = vunpack.c.h.b16 %v477
    %v680 = vunpack.c.l.b16 %v478
    %v681 = vunpack.c.h.b16 %v478
    %v682 = vunpack.c.l.b16 %v479
    %v683 = vunpack.c.h.b16 %v479
    %v684 = vunpack.c.l.b16 %v480
    %v685 = vunpack.c.l.b16 %v481
    %v686 = vunpack.c.h.b16 %v481
    %v687 = vunpack.c.l.b16 %v482
    %v688 = vunpack.c.h.b16 %v482
    %v689 = vunpack.c.l.b16 %v483
    %v690 = vunpack.c.h.b16 %v483
    %v691 = vunpack.c.l.b16 %v484
    %v692 = vunpack.c.l.b16 %v485
    %v693 = vunpack.c.h.b16 %v485
    %v694 = vunpack.c.l.b16 %v486
    %v695 = vunpack.c.h.b16 %v486
    %v696 = vunpack.c.l.b16 %v487
    %v697 = vunpack.c.h.b16 %v487
    %v698 = vunpack.c.l.b16 %v488
    %v699 = vunpack.c.l.b16 %v489
    %v700 = vunpack.c.h.b16 %v489
    %v701 = vunpack.c.l.b16 %v490
    %v702 = vunpack.c.h.b16 %v490
    %v703 = vunpack.c.l.b16 %v491
    %v704 = vunpack.c.h.b16 %v491
    %v705 = vunpack.c.l.b16 %v492
    %v706 = vpack.c.b16 %v601, %v594
    %v707 = vpack.c.b16 %v602, %v595
    %v708 = vpack.c.b16 %v603, %v596
    %v709 = vpack.c.b16 %v604, %v597
    %v710 = vpack.c.b16 %v605, %v598
    %v711 = vpack.c.b16 %v606, %v599
    %v712 = vpack.c.b16 %v607, %v600
    %v713 = vpack.c.b16 %v615, %v608
    %v714 = vpack.c.b16 %v616, %v609
    %v715 = vpack.c.b16 %v617, %v610
    %v716 = vpack.c.b16 %v618, %v611
    %v717 = vpack.c.b16 %v619, %v612
    %v718 = vpack.c.b16 %v620, %v613
    %v719 = vpack.c.b16 %v621, %v614
    %v720 = vpack.c.b16 %v629, %v622
    %v721 = vpack.c.b16 %v630, %v623
    %v722 = vpack.c.b16 %v631, %v624
    %v723 = vpack.c.b16 %v632, %v625
    %v724 = vpack.c.b16 %v633, %v626
    %v725 = vpack.c.b16 %v634, %v627
    %v726 = vpack.c.b16 %v635, %v628
    %v727 = vpack.c.b16 %v643, %v636
    %v728 = vpack.c.b16 %v644, %v637
    %v729 = vpack.c.b16 %v645, %v638
    %v730 = vpack.c.b16 %v646, %v639
    %v731 = vpack.c.b16 %v647, %v640
    %v732 = vpack.c.b16 %v648, %v641
    %v733 = vpack.c.b16 %v649, %v642
    %v734 = vpack.c.b16 %v657, %v650
    %v735 = vpack.c.b16 %v658, %v651
    %v736 = vpack.c.b16 %v659, %v652
    %v737 = vpack.c.b16 %v660, %v653
    %v738 = vpack.c.b16 %v661, %v654
    %v739 = vpack.c.b16 %v662, %v655
    %v740 = vpack.c.b16 %v663, %v656
    %v741 = vpack.c.b16 %v671, %v664
    %v742 = vpack.c.b16 %v672, %v665
    %v743 = vpack.c.b16 %v673, %v666
    %v744 = vpack.c.b16 %v674, %v667
    %v745 = vpack.c.b16 %v675, %v668
    %v746 = vpack.c.b16 %v676, %v669
    %v747 = vpack.c.b16 %v677, %v670
    %v748 = vpack.c.b16 %v685, %v678
    %v749 = vpack.c.b16 %v686, %v679
    %v750 = vpack.c.b16 %v687, %v680
    %v751 = vpack.c.b16 %v688, %v681
    %v752 = vpack.c.b16 %v689, %v682
    %v753 = vpack.c.b16 %v690, %v683
    %v754 = vpack.c.b16 %v691, %v684
    %v755 = vpack.c.b16 %v699, %v692
    %v756 = vpack.c.b16 %v700, %v693
    %v757 = vpack.c.b16 %v701, %v694
    %v758 = vpack.c.b16 %v702, %v695
    %v759 = vpack.c.b16 %v703, %v696
    %v760 = vpack.c.b16 %v704, %v697
    %v761 = vpack.c.b16 %v705, %v698
    %818 = vmatprep.subr.bf16.mxu0 %v707
    %819 = vmatpush1.bf16.msra.mxu0 %v706
    %820 = vmatprep.subr.bf16.mxu0 %v714
    %821 = vmatpush1.bf16.msra.mxu0 %v713
    %822 = vmatprep.subr.bf16.mxu0 %v721
    %823 = vmatpush1.bf16.msra.mxu0 %v720
    %824 = vmatprep.subr.bf16.mxu0 %v728
    %825 = vmatpush1.bf16.msra.mxu0 %v727
    %826 = vmatprep.subr.bf16.mxu0 %v735
    %827 = vmatpush1.bf16.msra.mxu0 %v734
    %828 = vmatprep.subr.bf16.mxu0 %v742
    %829 = vmatpush1.bf16.msra.mxu0 %v741
    %830 = vmatprep.subr.bf16.mxu0 %v749
    %831 = vmatpush1.bf16.msra.mxu0 %v748
    %832 = vmatprep.subr.bf16.mxu0 %v756
    %833 = vmatpush1.bf16.msra.mxu0 %v755
    %834 = vmatprep.subr.bf16.mxu0 0
    %835 = vmatpush1.bf16.msra.mxu0 0
    %836 = vmatprep.subr.bf16.mxu0 0
    %837 = vmatpush1.bf16.msra.mxu0 0
    %838 = vmatprep.subr.bf16.mxu0 0
    %839 = vmatpush1.bf16.msra.mxu0 0
    %840 = vmatprep.subr.bf16.mxu0 0
    %841 = vmatpush1.bf16.msra.mxu0 0
    %842 = vmatprep.subr.bf16.mxu0 0
    %843 = vmatpush1.bf16.msra.mxu0 0
    %844 = vmatprep.subr.bf16.mxu0 0
    %845 = vmatpush1.bf16.msra.mxu0 0
    %846 = vmatprep.subr.bf16.mxu0 0
    %847 = vmatpush1.bf16.msra.mxu0 0
    %848 = vmatprep.subr.bf16.mxu0 0
    %849 = vmatpush1.bf16.msra.mxu0 0
    %850 = vmatprep.mubr.bf16.mxu0 0
    %851 = vmatmul.mubr.bf16.gmra.mrb[0].mxu0 %v428
    %v852 = vpop.f32.mrb[0].mxu0
    %v853 = vadd.f32 %v498, %v852
    %v854 = vpop.f32.mrb[0].mxu0
    %v855 = vadd.f32 %v502, %v854
    %v856 = vpop.f32.mrb[0].mxu0
    %v857 = vpop.f32.mrb[0].mxu0
    %858 = vdwg.mxu0
    %859 = vmatprep.subr.bf16.mxu0 %v709
    %860 = vmatpush1.bf16.msra.mxu0 %v708
    %861 = vmatprep.subr.bf16.mxu0 %v716
    %862 = vmatpush1.bf16.msra.mxu0 %v715
    %863 = vmatprep.subr.bf16.mxu0 %v723
    %864 = vmatpush1.bf16.msra.mxu0 %v722
    %865 = vmatprep.subr.bf16.mxu0 %v730
    %866 = vmatpush1.bf16.msra.mxu0 %v729
    %867 = vmatprep.subr.bf16.mxu0 %v737
    %868 = vmatpush1.bf16.msra.mxu0 %v736
    %869 = vmatprep.subr.bf16.mxu0 %v744
    %870 = vmatpush1.bf16.msra.mxu0 %v743
    %871 = vmatprep.subr.bf16.mxu0 %v751
    %872 = vmatpush1.bf16.msra.mxu0 %v750
    %873 = vmatprep.subr.bf16.mxu0 %v758
    %874 = vmatpush1.bf16.msra.mxu0 %v757
    %875 = vmatprep.subr.bf16.mxu0 0
    %876 = vmatpush1.bf16.msra.mxu0 0
    %877 = vmatprep.subr.bf16.mxu0 0
    %878 = vmatpush1.bf16.msra.mxu0 0
    %879 = vmatprep.subr.bf16.mxu0 0
    %880 = vmatpush1.bf16.msra.mxu0 0
    %881 = vmatprep.subr.bf16.mxu0 0
    %882 = vmatpush1.bf16.msra.mxu0 0
    %883 = vmatprep.subr.bf16.mxu0 0
    %884 = vmatpush1.bf16.msra.mxu0 0
    %885 = vmatprep.subr.bf16.mxu0 0
    %886 = vmatpush1.bf16.msra.mxu0 0
    %887 = vmatprep.subr.bf16.mxu0 0
    %888 = vmatpush1.bf16.msra.mxu0 0
    %889 = vmatprep.subr.bf16.mxu0 0
    %890 = vmatpush1.bf16.msra.mxu0 0
    %891 = vmatprep.mubr.bf16.mxu0 0
    %892 = vmatmul.mubr.bf16.gmra.mrb[0].mxu0 %v428
    %v893 = vpop.f32.mrb[0].mxu0
    %v894 = vadd.f32 %v506, %v893
    %v895 = vpop.f32.mrb[0].mxu0
    %v896 = vadd.f32 %v510, %v895
    %v897 = vpop.f32.mrb[0].mxu0
    %v898 = vpop.f32.mrb[0].mxu0
    %899 = vdwg.mxu0
    %900 = vmatprep.subr.bf16.mxu0 %v711
    %901 = vmatpush1.bf16.msra.mxu0 %v710
    %902 = vmatprep.subr.bf16.mxu0 %v718
    %903 = vmatpush1.bf16.msra.mxu0 %v717
    %904 = vmatprep.subr.bf16.mxu0 %v725
    %905 = vmatpush1.bf16.msra.mxu0 %v724
    %906 = vmatprep.subr.bf16.mxu0 %v732
    %907 = vmatpush1.bf16.msra.mxu0 %v731
    %908 = vmatprep.subr.bf16.mxu0 %v739
    %909 = vmatpush1.bf16.msra.mxu0 %v738
    %910 = vmatprep.subr.bf16.mxu0 %v746
    %911 = vmatpush1.bf16.msra.mxu0 %v745
    %912 = vmatprep.subr.bf16.mxu0 %v753
    %913 = vmatpush1.bf16.msra.mxu0 %v752
    %914 = vmatprep.subr.bf16.mxu0 %v760
    %915 = vmatpush1.bf16.msra.mxu0 %v759
    %916 = vmatprep.subr.bf16.mxu0 0
    %917 = vmatpush1.bf16.msra.mxu0 0
    %918 = vmatprep.subr.bf16.mxu0 0
    %919 = vmatpush1.bf16.msra.mxu0 0
    %920 = vmatprep.subr.bf16.mxu0 0
    %921 = vmatpush1.bf16.msra.mxu0 0
    %922 = vmatprep.subr.bf16.mxu0 0
    %923 = vmatpush1.bf16.msra.mxu0 0
    %924 = vmatprep.subr.bf16.mxu0 0
    %925 = vmatpush1.bf16.msra.mxu0 0
    %926 = vmatprep.subr.bf16.mxu0 0
    %927 = vmatpush1.bf16.msra.mxu0 0
    %928 = vmatprep.subr.bf16.mxu0 0
    %929 = vmatpush1.bf16.msra.mxu0 0
    %930 = vmatprep.subr.bf16.mxu0 0
    %931 = vmatpush1.bf16.msra.mxu0 0
    %932 = vmatprep.mubr.bf16.mxu0 0
    %933 = vmatmul.mubr.bf16.gmra.mrb[0].mxu0 %v428
    %v934 = vpop.f32.mrb[0].mxu0
    %v935 = vadd.f32 %v514, %v934
    %v936 = vpop.f32.mrb[0].mxu0
    %v937 = vadd.f32 %v518, %v936
    %v938 = vpop.f32.mrb[0].mxu0
    %v939 = vpop.f32.mrb[0].mxu0
    %940 = vdwg.mxu0
    %941 = vmatprep.subr.bf16.mxu0 0
    %942 = vmatpush1.bf16.msra.mxu0 %v712
    %943 = vmatprep.subr.bf16.mxu0 0
    %944 = vmatpush1.bf16.msra.mxu0 %v719
    %945 = vmatprep.subr.bf16.mxu0 0
    %946 = vmatpush1.bf16.msra.mxu0 %v726
    %947 = vmatprep.subr.bf16.mxu0 0
    %948 = vmatpush1.bf16.msra.mxu0 %v733
    %949 = vmatprep.subr.bf16.mxu0 0
    %950 = vmatpush1.bf16.msra.mxu0 %v740
    %951 = vmatprep.subr.bf16.mxu0 0
    %952 = vmatpush1.bf16.msra.mxu0 %v747
    %953 = vmatprep.subr.bf16.mxu0 0
    %954 = vmatpush1.bf16.msra.mxu0 %v754
    %955 = vmatprep.subr.bf16.mxu0 0
    %956 = vmatpush1.bf16.msra.mxu0 %v761
    %957 = vmatprep.subr.bf16.mxu0 0
    %958 = vmatpush1.bf16.msra.mxu0 0
    %959 = vmatprep.subr.bf16.mxu0 0
    %960 = vmatpush1.bf16.msra.mxu0 0
    %961 = vmatprep.subr.bf16.mxu0 0
    %962 = vmatpush1.bf16.msra.mxu0 0
    %963 = vmatprep.subr.bf16.mxu0 0
    %964 = vmatpush1.bf16.msra.mxu0 0
    %965 = vmatprep.subr.bf16.mxu0 0
    %966 = vmatpush1.bf16.msra.mxu0 0
    %967 = vmatprep.subr.bf16.mxu0 0
    %968 = vmatpush1.bf16.msra.mxu0 0
    %969 = vmatprep.subr.bf16.mxu0 0
    %970 = vmatpush1.bf16.msra.mxu0 0
    %971 = vmatprep.subr.bf16.mxu0 0
    %972 = vmatpush1.bf16.msra.mxu0 0
    %973 = vmatprep.mubr.bf16.mxu0 0
    %974 = vmatmul.mubr.bf16.gmra.mrb[0].mxu0 %v428
    %v975 = vpop.f32.mrb[0].mxu0
    %v976 = vadd.f32 %v522, %v975
    %v977 = vpop.f32.mrb[0].mxu0
    %v978 = vpop.f32.mrb[0].mxu0
    %v979 = vpop.f32.mrb[0].mxu0
    %980 = vdwg.mxu0
    %v981 = vsub.f32 0.0, %v853
    %v982 = vsub.f32 0.0, %v855
    %v983 = vsub.f32 0.0, %v894
    %v984 = vsub.f32 0.0, %v896
    %v985 = vsub.f32 0.0, %v935
    %v986 = vsub.f32 0.0, %v937
    %v987 = vsub.f32 0.0, %v976
    %v988 = vmul.f32 %v981, 1.442695
    %v989 = vpow.pop %v988
    %v990 = vmul.f32 %v982, 1.442695
    %v991 = vpow.pop %v990
    %v992 = vmul.f32 %v983, 1.442695
    %v993 = vpow.pop %v992
    %v994 = vmul.f32 %v984, 1.442695
    %v995 = vpow.pop %v994
    %v996 = vmul.f32 %v985, 1.442695
    %v997 = vpow.pop %v996
    %v998 = vmul.f32 %v986, 1.442695
    %v999 = vpow.pop %v998
    %v1000 = vmul.f32 %v987, 1.442695
    %v1001 = vpow.pop %v1000
    %v1002 = vadd.f32 %v989, 1.0
    %v1003 = vadd.f32 %v991, 1.0
    %v1004 = vadd.f32 %v993, 1.0
    %v1005 = vadd.f32 %v995, 1.0
    %v1006 = vadd.f32 %v997, 1.0
    %v1007 = vadd.f32 %v999, 1.0
    %v1008 = vadd.f32 %v1001, 1.0
    %v1009 = vrcp.pop %v1002
    %v1010 = vrcp.pop %v1003
    %v1011 = vrcp.pop %v1004
    %v1012 = vrcp.pop %v1005
    %v1013 = vrcp.pop %v1006
    %v1014 = vrcp.pop %v1007
    %v1015 = vrcp.pop %v1008
    %1016 = vst [vmem:[#allocation11] sm:$0xff] %v1009
    %1017 = vst [vmem:[#allocation11 + $0x8] sm:$0xff] %v1010
    %1018 = vst [vmem:[#allocation11 + $0x10] sm:$0xff] %v1011
    %1019 = vst [vmem:[#allocation11 + $0x18] sm:$0xff] %v1012
    %1020 = vst [vmem:[#allocation11 + $0x20] sm:$0xff] %v1013
    %1021 = vst [vmem:[#allocation11 + $0x28] sm:$0xff] %v1014
    %1022 = vst [vmem:[#allocation11 + $0x30] sm:$0xff] %v1015
    // Predicated region
    $region46: #{decoder_forward.1} parent=1 // pred_check
      _
    $region47: #{decoder_forward.1} parent=1 // pred_check_branch
      %1024 = sbr.rel (0) target = $region49
    $region48: #{decoder_forward.1} parent=1 // pred_region
      %s1026 = ssub.s32 896, 896
      %1027 = vsyncadd [#allocation4], %s1026
      %s1029 = sshll.u32 [#allocation11], 4
      %s1030 = int_to_ptr.vmem [resolvable:$true] %s1029
      %1032 = dma.vmem_to_hbm [thread:$0]  %s1030, 896, %s6, [#allocation4]
    $region49: #{decoder_forward.1} parent=1 // pred_fallthru
      _
    // Predicated region
    $region50: #{decoder_forward.1} parent=1 // pred_check
      _
    $region51: #{decoder_forward.1} parent=1 // pred_check_branch
      %1034 = sbr.rel (0) target = $region53
    $region52: #{decoder_forward.1} parent=1 // pred_region
      %1035 = dma.done [#allocation4], 896
    $region53: #{decoder_forward.1} parent=1 // pred_fallthru
      _
    %1036 = vsyncpa [#allocation3], 1
    %1037 = vsyncpa [#allocation6], 1
    %1038 = vsyncpa [#allocation9], 1
    %1039 = vsyncpa [#allocation4], 1

</llo_original>
